<compile_context>
chip_gen: v6e
topology: v6e:2x2x1
jax: 0.10.0
libtpu: 0.0.40
codegen_flags: <defaults>
</compile_context>

<pallas_src>
import functools
import math

import jax
import jax.numpy as jnp
from jax.experimental import pallas as pl
from jax.experimental.pallas import tpu as pltpu


# ---------------------------------------------------------------------------
# helpers
# ---------------------------------------------------------------------------
def _cdiv(a, b):
    return -(-a // b)


def _pick_tn(p):
    """Pixel (lane) tile width for the conv-stage kernels.

    Multiple of 128, capped at 2048 (amortises the ~0.35us per-grid-step
    overhead while keeping the double-buffered VMEM footprint small).
    Preference order: >= 2 grid tiles when p > 128 (v7x megacore), minimal
    ragged-tile waste, even tile count, larger tile.
    """
    if p <= 128:
        return p                            # one full-extent tile (legal for any p)
    best_tn, best_key = None, None
    for tn in range(128, 2048 + 1, 128):
        m = _cdiv(p, tn)
        if m < 2:
            continue
        key = (m * tn - p, m % 2, -tn)
        if best_key is None or key < best_key:
            best_tn, best_key = tn, key
    return best_tn


# ---------------------------------------------------------------------------
# Pass 1: per-tile BatchNorm statistics (recomputes the tiny GEMM, writes only
# tiny per-tile centered sums -- no wide intermediate touches HBM).
# ---------------------------------------------------------------------------
@functools.cache
def _build_stats(k, cout2, p, tn):
    m_tiles = _cdiv(p, tn)

    def kernel(w_ref, x_ref, s_ref, q_ref):
        i = pl.program_id(0)
        # MXU: (cout2, k) @ (k, tn) -> (cout2, tn), f32 operands / f32 accum.
        y = jnp.dot(w_ref[...], x_ref[...], preferred_element_type=jnp.float32)

        # Mask the ragged last tile (Pallas pads OOB input lanes with
        # undefined data; keep the BN statistics exact over the true P pixels).
        rem = p - i * tn
        lane = jax.lax.broadcasted_iota(jnp.int32, y.shape, 1)
        valid = lane < rem
        n_valid = jnp.minimum(rem, tn).astype(jnp.float32)

        y_m = jnp.where(valid, y, 0.0)
        s = jnp.sum(y_m, axis=1, keepdims=True)               # (cout2, 1)
        mu = s / n_valid                                       # tile mean
        d = jnp.where(valid, y - mu, 0.0)
        q = jnp.sum(d * d, axis=1, keepdims=True)              # centered SS

        s_ref[...] = s[None]                                   # (1, cout2, 1)
        q_ref[...] = q[None]

    return pl.pallas_call(
        kernel,
        out_shape=(
            jax.ShapeDtypeStruct((m_tiles, cout2, 1), jnp.float32),
            jax.ShapeDtypeStruct((m_tiles, cout2, 1), jnp.float32),
        ),
        grid=(m_tiles,),
        in_specs=[
            pl.BlockSpec((cout2, k), lambda i: (0, 0)),        # weights, resident
            pl.BlockSpec((k, tn), lambda i: (0, i)),           # lane-dense X tile
        ],
        out_specs=(
            pl.BlockSpec((1, cout2, 1), lambda i: (i, 0, 0)),
            pl.BlockSpec((1, cout2, 1), lambda i: (i, 0, 0)),
        ),
        compiler_params=pltpu.CompilerParams(
            dimension_semantics=("parallel",)),
        cost_estimate=pl.CostEstimate(
            flops=2 * p * k * cout2 + 6 * p * cout2,
            transcendentals=0,
            bytes_accessed=p * k * 4 + cout2 * k * 4 + 2 * m_tiles * cout2 * 4),
    )


# ---------------------------------------------------------------------------
# Pass 2: fused 1x1 conv (recomputed) + BN affine + ReLU, writing the exact
# (2*Cout, P) output -- no padded intermediate, no post-kernel slice.
# ---------------------------------------------------------------------------
@functools.cache
def _build_fused_conv_bn_relu(k, cout2, p, tn):
    m_tiles = _cdiv(p, tn)

    def kernel(w_ref, scale_ref, shift_ref, x_ref, o_ref):
        y = jnp.dot(w_ref[...], x_ref[...], preferred_element_type=jnp.float32)
        o_ref[...] = jnp.maximum(y * scale_ref[...] + shift_ref[...], 0.0)

    return pl.pallas_call(
        kernel,
        out_shape=jax.ShapeDtypeStruct((cout2, p), jnp.float32),
        grid=(m_tiles,),
        in_specs=[
            pl.BlockSpec((cout2, k), lambda i: (0, 0)),        # weights
            pl.BlockSpec((cout2, 1), lambda i: (0, 0)),        # BN scale
            pl.BlockSpec((cout2, 1), lambda i: (0, 0)),        # BN shift
            pl.BlockSpec((k, tn), lambda i: (0, i)),           # X tile
        ],
        out_specs=pl.BlockSpec((cout2, tn), lambda i: (0, i)),
        compiler_params=pltpu.CompilerParams(
            dimension_semantics=("parallel",)),
        cost_estimate=pl.CostEstimate(
            flops=2 * p * k * cout2 + 3 * p * cout2,
            transcendentals=0,
            bytes_accessed=p * k * 4 + p * cout2 * 4 + cout2 * (k + 2) * 4),
    )


# ---------------------------------------------------------------------------
# 1x1 conv (no bias) + BatchNorm2d (training-mode batch stats) + ReLU,
# operating on the transposed (channel, pixel) layout.
# ---------------------------------------------------------------------------
def conv1x1_bn_relu_t(xt, w, gamma, beta, eps=1e-5):
    """xt: (2*Cin, P) f32;  w: (2*Cout, 2*Cin);  gamma/beta: (2*Cout,).

    Returns relu(batchnorm(w @ xt)) with shape (2*Cout, P), f32.
    """
    k, p = xt.shape
    cout2 = w.shape[0]
    tn = _pick_tn(p)
    m_tiles = _cdiv(p, tn)

    w = w.astype(jnp.float32)
    xt = xt.astype(jnp.float32)

    # ---- pass 1: per-tile centered sums -> global BN batch statistics ------
    s_t, q_t = _build_stats(k, cout2, p, tn)(w, xt)
    s_t = s_t[:, :, 0]                                         # (m_tiles, cout2)
    q_t = q_t[:, :, 0]

    n_t = jnp.minimum(tn, p - jnp.arange(m_tiles) * tn).astype(jnp.float32)
    mean = jnp.sum(s_t, axis=0) / p
    mu_t = s_t / n_t[:, None]
    # Chan's parallel combination: SS = sum_t q_t + sum_t n_t*(mu_t - mean)^2.
    ss = jnp.sum(q_t, axis=0) + jnp.sum(
        n_t[:, None] * jnp.square(mu_t - mean[None, :]), axis=0)
    var = jnp.maximum(ss / p, 0.0)                             # biased, as BN uses

    scale = gamma.astype(jnp.float32) * jax.lax.rsqrt(var + eps)
    shift = beta.astype(jnp.float32) - mean * scale

    # ---- pass 2: fused conv + affine + ReLU, exact output shape ------------
    return _build_fused_conv_bn_relu(k, cout2, p, tn)(
        w, scale.reshape(cout2, 1), shift.reshape(cout2, 1), xt)


# ---------------------------------------------------------------------------
# FourierUnit forward (matches the PyTorch module semantics)
# ---------------------------------------------------------------------------
def fourier_unit_forward(params, x_nchw, eps=1e-5):
    """x_nchw: (N, C, H, W) -> (N, Cout, H, W)."""
    n, c, h, w = x_nchw.shape
    x = x_nchw.astype(jnp.float32)

    # TODO(synk): rfft2/irfft2 have no Pallas equivalent; jnp.fft glue.
    # norm="ortho" matches torch.fft.rfft2/irfft2(norm='ortho') exactly.
    ff = jnp.fft.rfft2(x, axes=(2, 3), norm="ortho")           # (N, C, H, Wr) c64
    wr = ff.shape[-1]
    p = n * h * wr

    # Channel-major, (re, im)-interleaved rows (matches torch's permute/view:
    # channel 2c = Re(c), 2c+1 = Im(c)); pixels flattened on the lane axis.
    xt = jnp.stack([jnp.real(ff), jnp.imag(ff)], axis=2)       # (N, C, 2, H, Wr)
    xt = jnp.transpose(xt, (1, 2, 0, 3, 4)).reshape(2 * c, p)  # (2C, P)

    y = conv1x1_bn_relu_t(xt, params["w"], params["gamma"], params["beta"],
                          eps=eps)                             # (2*Cout, P)

    cout2 = y.shape[0]
    y = y.reshape(cout2 // 2, 2, n, h, wr)                     # free reshape
    comp = jax.lax.complex(y[:, 0], y[:, 1])                   # (Cout, N, H, Wr)
    out = jnp.fft.irfft2(comp, s=(h, w), axes=(2, 3), norm="ortho")
    return jnp.transpose(out, (1, 0, 2, 3))                    # (N, Cout, H, W)


# ---------------------------------------------------------------------------
# Pure-JAX reference (mirrors the PyTorch code literally, f32) for validation
# ---------------------------------------------------------------------------
def fourier_unit_reference(params, x_nchw, eps=1e-5):
    n, c, h, w = x_nchw.shape
    ff = jnp.fft.rfft2(x_nchw.astype(jnp.float32), axes=(2, 3), norm="ortho")
    wr = ff.shape[-1]
    y = jnp.stack([jnp.real(ff), jnp.imag(ff)], axis=2).reshape(n, 2 * c, h, wr)
    y = jnp.einsum("nkhw,dk->ndhw", y, params["w"],
                   precision=jax.lax.Precision.HIGHEST)
    mean = y.mean(axis=(0, 2, 3), keepdims=True)
    var = jnp.square(y - mean).mean(axis=(0, 2, 3), keepdims=True)
    y = (y - mean) * jax.lax.rsqrt(var + eps)
    y = y * params["gamma"][None, :, None, None] + params["beta"][None, :, None, None]
    y = jnp.maximum(y, 0.0)
    cout2 = y.shape[1]
    y = y.reshape(n, cout2 // 2, 2, h, wr).transpose(0, 1, 3, 4, 2)
    comp = jax.lax.complex(y[..., 0], y[..., 1])
    return jnp.fft.irfft2(comp, s=(h, w), axes=(2, 3), norm="ortho")


# ---------------------------------------------------------------------------
if __name__ == "__main__":
    B, C, H, W = 2, 4, 16, 16
    C_OUT = 4

    key = jax.random.PRNGKey(0)
    k_x, k_w, k_g, k_b = jax.random.split(key, 4)
    x = jax.random.normal(k_x, (B, C, H, W), jnp.float32)

    # Conv2d(2C, 2C_out, 1, bias=False) default init, stored as (2*Cout, 2*Cin).
    bound = 1.0 / math.sqrt(2 * C)
    params = {
        "w": jax.random.uniform(k_w, (2 * C_OUT, 2 * C), jnp.float32, -bound, bound),
        "gamma": jax.random.uniform(k_g, (2 * C_OUT,), jnp.float32, 0.5, 1.5),
        "beta": 0.1 * jax.random.normal(k_b, (2 * C_OUT,), jnp.float32),
    }

    fwd = jax.jit(functools.partial(fourier_unit_forward, params))
    out = jax.block_until_ready(fwd(x))

    assert out.shape == (B, C_OUT, H, W), out.shape
    assert bool(jnp.all(jnp.isfinite(out)))

    ref = fourier_unit_reference(params, x)
    err = float(jnp.max(jnp.abs(out - ref)))
    assert err < 2e-2, f"max abs err vs reference: {err}"

    print("KERNEL_OK")
</pallas_src>

<mosaic_0001>
module attributes {stable_mosaic.version = 11 : i64} {
  func.func @kernel(%arg0: i32, %arg1: memref<8x8xf32, #tpu.memory_space<vmem>>, %arg2: memref<8x128xf32, #tpu.memory_space<vmem>>, %arg3: memref<1x8x1xf32, #tpu.memory_space<vmem>>, %arg4: memref<1x8x1xf32, #tpu.memory_space<vmem>>) attributes {dimension_semantics = [#tpu.dimension_semantics<parallel>], iteration_bounds = array<i64: 3>, scalar_prefetch = 0 : i64, scratch_operands = 0 : i64, tpu.core_type = #tpu.core_type<tc>, window_params = [{pipeline_mode = #tpu.pipeline_mode<synchronous>, transform_indices = @transform_0, window_bounds = array<i64: 8, 8>}, {transform_indices = @transform_1, window_bounds = array<i64: 8, 128>}, {transform_indices = @transform_2, window_bounds = array<i64: 1, 8, 1>}, {transform_indices = @transform_3, window_bounds = array<i64: 1, 8, 1>}]} {
    %c0 = arith.constant 0 : index
    %c0_0 = arith.constant 0 : index
    %0 = vector.load %arg1[%c0, %c0_0] : memref<8x8xf32, #tpu.memory_space<vmem>>, vector<8x8xf32>
    %c0_1 = arith.constant 0 : index
    %c0_2 = arith.constant 0 : index
    %1 = vector.load %arg2[%c0_1, %c0_2] : memref<8x128xf32, #tpu.memory_space<vmem>>, vector<8x128xf32>
    %cst = arith.constant dense<0.000000e+00> : vector<8x128xf32>
    %2 = tpu.matmul %0, %1, %cst {dimension_numbers = #tpu.dot_dimension_numbers<[1], [0], [0], [1], [0, 0, 1, 1], [], []>} : vector<8x8xf32>, vector<8x128xf32>, vector<8x128xf32> -> vector<8x128xf32>
    %c128_i32 = arith.constant 128 : i32
    %3 = arith.muli %arg0, %c128_i32 : i32
    %c288_i32 = arith.constant 288 : i32
    %4 = arith.subi %c288_i32, %3 : i32
    %5 = tpu.iota {dimensions = array<i32: 1>} : vector<8x128xi32>
    %6 = vector.broadcast %4 : i32 to vector<8x128xi32>
    %7 = arith.cmpi slt, %5, %6 : vector<8x128xi32>
    %c128_i32_3 = arith.constant 128 : i32
    %8 = arith.minsi %4, %c128_i32_3 : i32
    %9 = arith.sitofp %8 : i32 to f32
    %cst_4 = arith.constant 0.000000e+00 : f32
    %10 = vector.broadcast %cst_4 : f32 to vector<8x128xf32>
    %11 = arith.select %7, %2, %10 : vector<8x128xi1>, vector<8x128xf32>
    %cst_5 = arith.constant dense<0.000000e+00> : vector<8xf32>
    %12 = vector.multi_reduction <add>, %11, %cst_5 [1] : vector<8x128xf32> to vector<8xf32>
    %13 = vector.shape_cast %12 : vector<8xf32> to vector<8x1xf32>
    %14 = vector.broadcast %9 : f32 to vector<8x1xf32>
    %15 = arith.divf %13, %14 : vector<8x1xf32>
    %16 = vector.broadcast %15 : vector<8x1xf32> to vector<8x128xf32>
    %17 = arith.subf %2, %16 : vector<8x128xf32>
    %cst_6 = arith.constant 0.000000e+00 : f32
    %18 = vector.broadcast %cst_6 : f32 to vector<8x128xf32>
    %19 = arith.select %7, %17, %18 : vector<8x128xi1>, vector<8x128xf32>
    %20 = arith.mulf %19, %19 : vector<8x128xf32>
    %cst_7 = arith.constant dense<0.000000e+00> : vector<8xf32>
    %21 = vector.multi_reduction <add>, %20, %cst_7 [1] : vector<8x128xf32> to vector<8xf32>
    %22 = vector.shape_cast %21 : vector<8xf32> to vector<8x1xf32>
    %23 = vector.shape_cast %13 : vector<8x1xf32> to vector<1x8x1xf32>
    %c0_8 = arith.constant 0 : index
    %c0_9 = arith.constant 0 : index
    %c0_10 = arith.constant 0 : index
    %24 = vector.load %arg3[%c0_8, %c0_9, %c0_10] : memref<1x8x1xf32, #tpu.memory_space<vmem>>, vector<1x8x1xf32>
    tpu.vector_store %arg3[%c0_8, %c0_9, %c0_10], %23 {strides = array<i32>} : memref<1x8x1xf32, #tpu.memory_space<vmem>>, vector<1x8x1xf32>,
    %25 = vector.shape_cast %22 : vector<8x1xf32> to vector<1x8x1xf32>
    %c0_11 = arith.constant 0 : index
    %c0_12 = arith.constant 0 : index
    %c0_13 = arith.constant 0 : index
    %26 = vector.load %arg4[%c0_11, %c0_12, %c0_13] : memref<1x8x1xf32, #tpu.memory_space<vmem>>, vector<1x8x1xf32>
    tpu.vector_store %arg4[%c0_11, %c0_12, %c0_13], %25 {strides = array<i32>} : memref<1x8x1xf32, #tpu.memory_space<vmem>>, vector<1x8x1xf32>,
    return
  }
  func.func @transform_0(%arg0: i32) -> (i32, i32) {
    %c0_i32 = arith.constant 0 : i32
    %c0_i32_0 = arith.constant 0 : i32
    %c0_i32_1 = arith.constant 0 : i32
    return %c0_i32, %c0_i32_0 : i32, i32
  }
  func.func @transform_1(%arg0: i32) -> (i32, i32) {
    %c0_i32 = arith.constant 0 : i32
    %c0_i32_0 = arith.constant 0 : i32
    return %c0_i32, %arg0 : i32, i32
  }
  func.func @transform_2(%arg0: i32) -> (i32, i32, i32) {
    %c0_i32 = arith.constant 0 : i32
    %c0_i32_0 = arith.constant 0 : i32
    %c0_i32_1 = arith.constant 0 : i32
    return %arg0, %c0_i32, %c0_i32_0 : i32, i32, i32
  }
  func.func @transform_3(%arg0: i32) -> (i32, i32, i32) {
    %c0_i32 = arith.constant 0 : i32
    %c0_i32_0 = arith.constant 0 : i32
    %c0_i32_1 = arith.constant 0 : i32
    return %arg0, %c0_i32, %c0_i32_0 : i32, i32, i32
  }
}

module attributes {stable_mosaic.version = 11 : i64} {
  func.func @kernel(%arg0: i32, %arg1: memref<8x8xf32, #tpu.memory_space<vmem>>, %arg2: memref<8x1xf32, #tpu.memory_space<vmem>>, %arg3: memref<8x1xf32, #tpu.memory_space<vmem>>, %arg4: memref<8x128xf32, #tpu.memory_space<vmem>>, %arg5: memref<8x128xf32, #tpu.memory_space<vmem>>) attributes {dimension_semantics = [#tpu.dimension_semantics<parallel>], iteration_bounds = array<i64: 3>, scalar_prefetch = 0 : i64, scratch_operands = 0 : i64, tpu.core_type = #tpu.core_type<tc>, window_params = [{pipeline_mode = #tpu.pipeline_mode<synchronous>, transform_indices = @transform_0, window_bounds = array<i64: 8, 8>}, {pipeline_mode = #tpu.pipeline_mode<synchronous>, transform_indices = @transform_1, window_bounds = array<i64: 8, 1>}, {pipeline_mode = #tpu.pipeline_mode<synchronous>, transform_indices = @transform_2, window_bounds = array<i64: 8, 1>}, {transform_indices = @transform_3, window_bounds = array<i64: 8, 128>}, {transform_indices = @transform_4, window_bounds = array<i64: 8, 128>}]} {
    %c0 = arith.constant 0 : index
    %c0_0 = arith.constant 0 : index
    %0 = vector.load %arg1[%c0, %c0_0] : memref<8x8xf32, #tpu.memory_space<vmem>>, vector<8x8xf32>
    %c0_1 = arith.constant 0 : index
    %c0_2 = arith.constant 0 : index
    %1 = vector.load %arg4[%c0_1, %c0_2] : memref<8x128xf32, #tpu.memory_space<vmem>>, vector<8x128xf32>
    %cst = arith.constant dense<0.000000e+00> : vector<8x128xf32>
    %2 = tpu.matmul %0, %1, %cst {dimension_numbers = #tpu.dot_dimension_numbers<[1], [0], [0], [1], [0, 0, 1, 1], [], []>} : vector<8x8xf32>, vector<8x128xf32>, vector<8x128xf32> -> vector<8x128xf32>
    %c0_3 = arith.constant 0 : index
    %c0_4 = arith.constant 0 : index
    %3 = vector.load %arg2[%c0_3, %c0_4] : memref<8x1xf32, #tpu.memory_space<vmem>>, vector<8x1xf32>
    %4 = vector.broadcast %3 : vector<8x1xf32> to vector<8x128xf32>
    %5 = arith.mulf %2, %4 : vector<8x128xf32>
    %c0_5 = arith.constant 0 : index
    %c0_6 = arith.constant 0 : index
    %6 = vector.load %arg3[%c0_5, %c0_6] : memref<8x1xf32, #tpu.memory_space<vmem>>, vector<8x1xf32>
    %7 = vector.broadcast %6 : vector<8x1xf32> to vector<8x128xf32>
    %8 = arith.addf %5, %7 : vector<8x128xf32>
    %cst_7 = arith.constant 0.000000e+00 : f32
    %9 = vector.broadcast %cst_7 : f32 to vector<8x128xf32>
    %10 = arith.maximumf %8, %9 : vector<8x128xf32>
    %c0_8 = arith.constant 0 : index
    %c0_9 = arith.constant 0 : index
    %11 = vector.load %arg5[%c0_8, %c0_9] : memref<8x128xf32, #tpu.memory_space<vmem>>, vector<8x128xf32>
    tpu.vector_store %arg5[%c0_8, %c0_9], %10 {strides = array<i32>} : memref<8x128xf32, #tpu.memory_space<vmem>>, vector<8x128xf32>,
    return
  }
  func.func @transform_0(%arg0: i32) -> (i32, i32) {
    %c0_i32 = arith.constant 0 : i32
    %c0_i32_0 = arith.constant 0 : i32
    %c0_i32_1 = arith.constant 0 : i32
    return %c0_i32, %c0_i32_0 : i32, i32
  }
  func.func @transform_1(%arg0: i32) -> (i32, i32) {
    %c0_i32 = arith.constant 0 : i32
    %c0_i32_0 = arith.constant 0 : i32
    %c0_i32_1 = arith.constant 0 : i32
    return %c0_i32, %c0_i32_0 : i32, i32
  }
  func.func @transform_2(%arg0: i32) -> (i32, i32) {
    %c0_i32 = arith.constant 0 : i32
    %c0_i32_0 = arith.constant 0 : i32
    %c0_i32_1 = arith.constant 0 : i32
    return %c0_i32, %c0_i32_0 : i32, i32
  }
  func.func @transform_3(%arg0: i32) -> (i32, i32) {
    %c0_i32 = arith.constant 0 : i32
    %c0_i32_0 = arith.constant 0 : i32
    return %c0_i32, %arg0 : i32, i32
  }
  func.func @transform_4(%arg0: i32) -> (i32, i32) {
    %c0_i32 = arith.constant 0 : i32
    %c0_i32_0 = arith.constant 0 : i32
    return %c0_i32, %arg0 : i32, i32
  }
}

</mosaic_0001>

<llo_original>
// kernel: fourier_unit_forward.2
$region0: #{fourier_unit_forward.2}
  #allocation0 [shape = 'u32[]', space=smem, size = 0x4, offset = 0x4, fixed_abs, tag = 'smem constant byte address 0x4 - core index']
  #allocation1 [shape = 'u32[144,128]{1,0:T(1,128)}', space=vmem, size = 0x12000, scoped, tag = 'internal scratch']
  %s0 = inlined_call_operand.vmem [shape: f32[8,8], index: 0, kind: input, shape index: {}]
  %s1 = inlined_call_operand.vmem [shape: f32[8,288], index: 1, kind: input, shape index: {}]
  %s2 = inlined_call_operand.vmem [shape: f32[3,8,1], index: 2, kind: output, shape index: {0}]
  %s3 = inlined_call_operand.vmem [shape: f32[3,8,1], index: 3, kind: output, shape index: {1}]
  %4 = xla_tuple %s2, %s3
  %s5 = sld [smem:[#allocation0]]
  $region49: #{fourier_unit_forward.2} parent=0
    _
  %s7 = ssub.s32 1, %s5
  %s8 = scalar_select 0, %s7, %s5
  loop: start=0, step=1, limit=5
  $region2: #{fourier_unit_forward.2} parent=0 // loop_pre_header
    _
  $region3: #{fourier_unit_forward.2} parent=0 // loop_header
    %s10 = sphi 0, %s14
    %p11 = scmp.ge.s32.totalorder %s10, 5
    %s18 = sphi 0, %s18
    %s20 = sphi 0, %s18
    %s21 = sphi 0, %s20
    %s35 = sphi 0, %s21
    %s41 = sphi 0, %s43
    %s44 = sphi 0, %s41
    %s45 = sphi 0, %s44
    %s61 = sphi 0, %s45
    %s67 = sphi 0, %s69
    %s70 = sphi 0, %s67
    %s71 = sphi 0, %s70
    %s87 = sphi 0, %s71
    %s93 = sphi 0, %s95
    %s96 = sphi 0, %s93
    %s97 = sphi 0, %s96
    %s113 = sphi 0, %s97
  $region4: #{fourier_unit_forward.2} parent=0 // loop_header_branch
    %13 = sbr.rel (%p11) target = $region8
  $region5: #{fourier_unit_forward.2} parent=0 // loop_body
    %s15 = ssub.s32 %s10, 1
    %s16 = ssub.s32 %s10, 2
    %s17 = sadd.s32 %s10, 1
    %s19 = sadd.s32 %s18, 1
    %p22 = scmp.eq.s32.totalorder %s10, 2
    %p23 = scmp.ne.s32.totalorder %s18, %s20
    %p24 = scmp.eq.s32.totalorder %s10, 0
    %p25 = por %p23, %p24
    %p26 = scmp.ne.s32.totalorder %s18, %s20
    %p27 = scmp.eq.s32.totalorder %s15, 2
    %p28 = por %p26, %p27
    %p29 = scmp.ne.s32.totalorder %s20, %s21
    %p30 = scmp.eq.s32.totalorder %s15, 0
    %p31 = por %p29, %p30
    %p32 = scmp.ne.s32.totalorder %s20, %s21
    %p33 = scmp.eq.s32.totalorder %s16, 2
    %p34 = por %p32, %p33
    %p36 = scmp.ne.s32.totalorder %s21, %s35
    %p37 = scmp.eq.s32.totalorder %s16, 0
    %p38 = por %p36, %p37
    %s39 = ssub.s32 %s10, %s17
    %p40 = scmp.eq.s32.totalorder %s39, 0
    %s42 = sadd.s32 %s41, 1
    %s43 = scalar_select %p40, %s41, %s42
    %p46 = pneg %p40
    %p47 = scmp.eq.s32.totalorder %s10, 2
    %p48 = por %p46, %p47
    %p49 = scmp.ne.s32.totalorder %s41, %s44
    %p50 = scmp.eq.s32.totalorder %s10, 0
    %p51 = por %p49, %p50
    %p52 = scmp.ne.s32.totalorder %s41, %s44
    %p53 = scmp.eq.s32.totalorder %s15, 2
    %p54 = por %p52, %p53
    %p55 = scmp.ne.s32.totalorder %s44, %s45
    %p56 = scmp.eq.s32.totalorder %s15, 0
    %p57 = por %p55, %p56
    %p58 = scmp.ne.s32.totalorder %s44, %s45
    %p59 = scmp.eq.s32.totalorder %s16, 2
    %p60 = por %p58, %p59
    %p62 = scmp.ne.s32.totalorder %s45, %s61
    %p63 = scmp.eq.s32.totalorder %s16, 0
    %p64 = por %p62, %p63
    %s65 = ssub.s32 %s10, %s17
    %p66 = scmp.eq.s32.totalorder %s65, 0
    %s68 = sadd.s32 %s67, 1
    %s69 = scalar_select %p66, %s67, %s68
    %p72 = pneg %p66
    %p73 = scmp.eq.s32.totalorder %s10, 2
    %p74 = por %p72, %p73
    %p75 = scmp.ne.s32.totalorder %s67, %s70
    %p76 = scmp.eq.s32.totalorder %s10, 0
    %p77 = por %p75, %p76
    %p78 = scmp.ne.s32.totalorder %s67, %s70
    %p79 = scmp.eq.s32.totalorder %s15, 2
    %p80 = por %p78, %p79
    %p81 = scmp.ne.s32.totalorder %s70, %s71
    %p82 = scmp.eq.s32.totalorder %s15, 0
    %p83 = por %p81, %p82
    %p84 = scmp.ne.s32.totalorder %s70, %s71
    %p85 = scmp.eq.s32.totalorder %s16, 2
    %p86 = por %p84, %p85
    %p88 = scmp.ne.s32.totalorder %s71, %s87
    %p89 = scmp.eq.s32.totalorder %s16, 0
    %p90 = por %p88, %p89
    %s91 = ssub.s32 %s10, %s17
    %p92 = scmp.eq.s32.totalorder %s91, 0
    %s94 = sadd.s32 %s93, 1
    %s95 = scalar_select %p92, %s93, %s94
    %p98 = pneg %p92
    %p99 = scmp.eq.s32.totalorder %s10, 2
    %p100 = por %p98, %p99
    %p101 = scmp.ne.s32.totalorder %s93, %s96
    %p102 = scmp.eq.s32.totalorder %s10, 0
    %p103 = por %p101, %p102
    %p104 = scmp.ne.s32.totalorder %s93, %s96
    %p105 = scmp.eq.s32.totalorder %s15, 2
    %p106 = por %p104, %p105
    %p107 = scmp.ne.s32.totalorder %s96, %s97
    %p108 = scmp.eq.s32.totalorder %s15, 0
    %p109 = por %p107, %p108
    %p110 = scmp.ne.s32.totalorder %s96, %s97
    %p111 = scmp.eq.s32.totalorder %s16, 2
    %p112 = por %p110, %p111
    %p114 = scmp.ne.s32.totalorder %s97, %s113
    %p115 = scmp.eq.s32.totalorder %s16, 0
    %p116 = por %p114, %p115
    %p117 = scmp.le.s32.totalorder 1, %s10
    %p118 = scmp.lt.s32.totalorder %s10, 4
    %p119 = pnand %p117, %p118
    %p120 = pneg %p119
    // Predicated region
    $region9: #{fourier_unit_forward.2} parent=5 // pred_check
      _
    $region10: #{fourier_unit_forward.2} parent=5 // pred_check_branch
      %122 = sbr.rel (%p119) target = $region12
    $region11: #{fourier_unit_forward.2} parent=5 // pred_region
      %s123 = ssub.s32 %s10, 1
      // Predicated region
      $region13: #{fourier_unit_forward.2} parent=11 // pred_check
        %p124 = pneg %p31
      $region14: #{fourier_unit_forward.2} parent=11 // pred_check_branch
        %126 = sbr.rel (%p124) target = $region16
      $region15: #{fourier_unit_forward.2} parent=11 // pred_region
        _
      $region16: #{fourier_unit_forward.2} parent=11 // pred_fallthru
        _
    $region12: #{fourier_unit_forward.2} parent=5 // pred_fallthru
      _
    %p127 = scmp.lt.s32.totalorder %s10, 3
    // Predicated region
    $region17: #{fourier_unit_forward.2} parent=5 // pred_check
      %p128 = pneg %p127
    $region18: #{fourier_unit_forward.2} parent=5 // pred_check_branch
      %130 = sbr.rel (%p128) target = $region20
    $region19: #{fourier_unit_forward.2} parent=5 // pred_region
      // Predicated region
      $region21: #{fourier_unit_forward.2} parent=19 // pred_check
        %p131 = pneg %p51
      $region22: #{fourier_unit_forward.2} parent=19 // pred_check_branch
        %133 = sbr.rel (%p131) target = $region24
      $region23: #{fourier_unit_forward.2} parent=19 // pred_region
        %p134 = scmp.lt.s32.totalorder %s10, 2
        %s135 = scalar_select %p134, %s10, 2
        %s136 = smul.addr %s135, 8
        %s137 = scalar_lea.vmem %s1, %s136
      $region24: #{fourier_unit_forward.2} parent=19 // pred_fallthru
        _
    $region20: #{fourier_unit_forward.2} parent=5 // pred_fallthru
      _
    %p138 = scmp.le.s32.totalorder 1, %s10
    %p139 = scmp.lt.s32.totalorder %s10, 4
    %p140 = pnand %p138, %p139
    %p141 = pneg %p140
    // Predicated region
    $region25: #{fourier_unit_forward.2} parent=5 // pred_check
      _
    $region26: #{fourier_unit_forward.2} parent=5 // pred_check_branch
      %143 = sbr.rel (%p140) target = $region28
    $region27: #{fourier_unit_forward.2} parent=5 // pred_region
      %s144 = ssub.s32 %s10, 1
      %p145 = pneg %p31
      %p146 = pneg %p28
      %p147 = scmp.lt.s32.totalorder %s15, 2
      %s148 = scalar_select %p147, %s15, 2
      %s149 = smul.addr %s148, 8
      %s150 = scalar_lea.vmem %s1, %s149
      %p151 = pneg %p57
      %p152 = pneg %p54
      %p153 = pneg %p83
      %p154 = pneg %p80
      %p155 = scmp.lt.s32.totalorder %s15, 2
      %s156 = scalar_select %p155, %s15, 2
      %s157 = smul.addr %s156, 8
      %s158 = scalar_lea.vmem %s2, %s157
      %p159 = pneg %p109
      %p160 = pneg %p106
      %p161 = scmp.lt.s32.totalorder %s15, 2
      %s162 = scalar_select %p161, %s15, 2
      %s163 = smul.addr %s162, 8
      %s164 = scalar_lea.vmem %s3, %s163
      %p165 = scmp.lt.s32.totalorder %s15, 2
      %s166 = scalar_select %p165, %s15, 2
      %s167 = smul.addr %s166, 8
      %s168 = scalar_lea.vmem %s1, %s167
      %p169 = scmp.lt.s32.totalorder %s15, 2
      %s170 = scalar_select %p169, %s15, 2
      %s171 = smul.addr %s170, 8
      %s172 = scalar_lea.vmem %s2, %s171
      %p173 = scmp.lt.s32.totalorder %s15, 2
      %s174 = scalar_select %p173, %s15, 2
      %s175 = smul.addr %s174, 8
      %s176 = scalar_lea.vmem %s3, %s175
      %v177 = vld [vmem:[%s0] sm:$0xff]
      %v178 = vld [vmem:[%s168] sm:$0xff]
      %vm179 = vcmask 64512
      %v181 = vsel %vm179, %v177, 0
      %183 = vmatprep.subr.mxu0 0.0
      %184 = vmatpush1.msra.mxu0 0.0
      %185 = vmatprep.subr.mxu0 0.0
      %186 = vmatpush1.msra.mxu0 0.0
      %187 = vmatprep.subr.mxu0 0.0
      %188 = vmatpush1.msra.mxu0 0.0
      %189 = vmatprep.subr.mxu0 0.0
      %190 = vmatpush1.msra.mxu0 0.0
      %191 = vmatprep.subr.mxu0 0.0
      %192 = vmatpush1.msra.mxu0 0.0
      %193 = vmatprep.subr.mxu0 0.0
      %194 = vmatpush1.msra.mxu0 0.0
      %195 = vmatprep.subr.mxu0 0.0
      %196 = vmatpush1.msra.mxu0 0.0
      %197 = vmatprep.subr.mxu0 0.0
      %198 = vmatpush1.msra.mxu0 0.0
      %199 = vmatprep.subr.mxu0 0.0
      %200 = vmatpush1.msra.mxu0 0.0
      %201 = vmatprep.subr.mxu0 0.0
      %202 = vmatpush1.msra.mxu0 0.0
      %203 = vmatprep.subr.mxu0 0.0
      %204 = vmatpush1.msra.mxu0 0.0
      %205 = vmatprep.subr.mxu0 0.0
      %206 = vmatpush1.msra.mxu0 0.0
      %207 = vmatprep.subr.mxu0 0.0
      %208 = vmatpush1.msra.mxu0 0.0
      %209 = vmatprep.subr.mxu0 0.0
      %210 = vmatpush1.msra.mxu0 0.0
      %211 = vmatprep.subr.mxu0 0.0
      %212 = vmatpush1.msra.mxu0 0.0
      %213 = vmatprep.subr.mxu0 0.0
      %214 = vmatpush1.msra.mxu0 %v178
      %215 = vmatprep.subr.mxu0 0.0
      %216 = vmatpush2.msra.mxu0 0.0
      %217 = vmatprep.subr.mxu0 0.0
      %218 = vmatpush2.msra.mxu0 0.0
      %219 = vmatprep.subr.mxu0 0.0
      %220 = vmatpush2.msra.mxu0 0.0
      %221 = vmatprep.subr.mxu0 0.0
      %222 = vmatpush2.msra.mxu0 0.0
      %223 = vmatprep.subr.mxu0 0.0
      %224 = vmatpush2.msra.mxu0 0.0
      %225 = vmatprep.subr.mxu0 0.0
      %226 = vmatpush2.msra.mxu0 0.0
      %227 = vmatprep.subr.mxu0 0.0
      %228 = vmatpush2.msra.mxu0 0.0
      %229 = vmatprep.subr.mxu0 0.0
      %230 = vmatpush2.msra.mxu0 0.0
      %231 = vmatprep.subr.mxu0 0.0
      %232 = vmatpush2.msra.mxu0 0.0
      %233 = vmatprep.subr.mxu0 0.0
      %234 = vmatpush2.msra.mxu0 0.0
      %235 = vmatprep.subr.mxu0 0.0
      %236 = vmatpush2.msra.mxu0 0.0
      %237 = vmatprep.subr.mxu0 0.0
      %238 = vmatpush2.msra.mxu0 0.0
      %239 = vmatprep.subr.mxu0 0.0
      %240 = vmatpush2.msra.mxu0 0.0
      %241 = vmatprep.subr.mxu0 0.0
      %242 = vmatpush2.msra.mxu0 0.0
      %243 = vmatprep.subr.mxu0 0.0
      %244 = vmatpush2.msra.mxu0 0.0
      %245 = vmatprep.subr.mxu0 0.0
      %246 = vmatpush2.msra.mxu0 0.0
      %247 = vmatprep.mubr.f32.mxu0 0.0
      %248 = vmatmul.mubr.f32.gmra.mxu0 %v181
      %v249 = vpop.f32.mrf.mxu0
      %v250 = vadd.f32 0.0, %v249
      %v251 = vpop.f32.mrf.mxu0
      %252 = vdwg.mxu0
      %s253 = smul.u32 %s15, 128
      %s254 = ssub.s32 288, %s253
      %v255 = vlaneseq
      %v256 = vand.u32 %v255, 127
      %v257 = vstv %s254
      %vm258 = vcmp.lt.s32.totalorder %v256, %v257
      %p259 = scmp.lt.s32.totalorder %s254, 128
      %s260 = scalar_select %p259, %s254, 128
      %s261 = scvt.s32.f32 %s260
      %v262 = vsel %vm258, %v250, 0.0
      %263 = vadd.xlane.f32.xlu0 %v262
      %v264 = vpop.xlane.xlu0 %263
      %v265 = vstv %s261
      %v266 = vrcp.pop %v265
      %v267 = vmul.f32 %v264, %v266
      %v268 = vsub.f32 %v250, %v267
      %v269 = vsel %vm258, %v268, 0.0
      %v270 = vmul.f32 %v269, %v269
      %271 = vadd.xlane.f32.xlu0 %v270
      %v272 = vpop.xlane.xlu0 %271
      %vm273 = vcmask 7168
      %274 = vst.msk [vmem:[%s172] sm:$0xff] %vm273, %v264
      %275 = vst.msk [vmem:[%s176] sm:$0xff] %vm273, %v272
      %p276 = scmp.lt.s32.totalorder %s15, 2
      %s277 = scalar_select %p276, %s15, 2
      %s278 = smul.addr %s277, 8
      %s279 = scalar_lea.vmem %s2, %s278
      %p280 = scmp.lt.s32.totalorder %s15, 2
      %s281 = scalar_select %p280, %s15, 2
      %s282 = smul.addr %s281, 8
      %s283 = scalar_lea.vmem %s3, %s282
      // Predicated region
      $region29: #{fourier_unit_forward.2} parent=27 // pred_check
        %p284 = pneg %p80
      $region30: #{fourier_unit_forward.2} parent=27 // pred_check_branch
        %286 = sbr.rel (%p284) target = $region32
      $region31: #{fourier_unit_forward.2} parent=27 // pred_region
        _
      $region32: #{fourier_unit_forward.2} parent=27 // pred_fallthru
        _
      // Predicated region
      $region33: #{fourier_unit_forward.2} parent=27 // pred_check
        %p287 = pneg %p106
      $region34: #{fourier_unit_forward.2} parent=27 // pred_check_branch
        %289 = sbr.rel (%p287) target = $region36
      $region35: #{fourier_unit_forward.2} parent=27 // pred_region
        _
      $region36: #{fourier_unit_forward.2} parent=27 // pred_fallthru
        _
    $region28: #{fourier_unit_forward.2} parent=5 // pred_fallthru
      _
    %p290 = scmp.le.s32.totalorder 2, %s10
    // Predicated region
    $region37: #{fourier_unit_forward.2} parent=5 // pred_check
      %p291 = pneg %p290
    $region38: #{fourier_unit_forward.2} parent=5 // pred_check_branch
      %293 = sbr.rel (%p291) target = $region40
    $region39: #{fourier_unit_forward.2} parent=5 // pred_region
      %s294 = ssub.s32 %s10, 2
      // Predicated region
      $region41: #{fourier_unit_forward.2} parent=39 // pred_check
        %p295 = pneg %p86
      $region42: #{fourier_unit_forward.2} parent=39 // pred_check_branch
        %297 = sbr.rel (%p295) target = $region44
      $region43: #{fourier_unit_forward.2} parent=39 // pred_region
        %p298 = scmp.lt.s32.totalorder %s16, 2
        %s299 = scalar_select %p298, %s16, 2
        %s300 = smul.addr %s299, 8
        %s301 = scalar_lea.vmem %s2, %s300
      $region44: #{fourier_unit_forward.2} parent=39 // pred_fallthru
        _
      // Predicated region
      $region45: #{fourier_unit_forward.2} parent=39 // pred_check
        %p302 = pneg %p112
      $region46: #{fourier_unit_forward.2} parent=39 // pred_check_branch
        %304 = sbr.rel (%p302) target = $region48
      $region47: #{fourier_unit_forward.2} parent=39 // pred_region
        %p305 = scmp.lt.s32.totalorder %s16, 2
        %s306 = scalar_select %p305, %s16, 2
        %s307 = smul.addr %s306, 8
        %s308 = scalar_lea.vmem %s3, %s307
      $region48: #{fourier_unit_forward.2} parent=39 // pred_fallthru
        _
    $region40: #{fourier_unit_forward.2} parent=5 // pred_fallthru
      _
  $region6: #{fourier_unit_forward.2} parent=0 // loop_footer
    %s14 = sadd.s32 1, %s10
  $region7: #{fourier_unit_forward.2} parent=0 // loop_footer_branch
    %9 = sbr.rel target = $region3
  $region8: #{fourier_unit_forward.2} parent=0 // loop_exit
    _

// kernel: fourier_unit_forward.3
$region0: #{fourier_unit_forward.3}
  #allocation0 [shape = 'u32[]', space=smem, size = 0x4, offset = 0x4, fixed_abs, tag = 'smem constant byte address 0x4 - core index']
  #allocation1 [shape = 'u32[144,128]{1,0:T(1,128)}', space=vmem, size = 0x12000, scoped, tag = 'internal scratch']
  %s0 = inlined_call_operand.vmem [shape: f32[8,8], index: 0, kind: input, shape index: {}]
  %s1 = inlined_call_operand.vmem [shape: f32[8,1], index: 1, kind: input, shape index: {}]
  %s2 = inlined_call_operand.vmem [shape: f32[8,1], index: 2, kind: input, shape index: {}]
  %s3 = inlined_call_operand.vmem [shape: f32[8,288], index: 3, kind: input, shape index: {}]
  %s4 = inlined_call_operand.vmem [shape: f32[8,288], index: 4, kind: output, shape index: {}]
  %s5 = sld [smem:[#allocation0]]
  $region49: #{fourier_unit_forward.3} parent=0
    _
  %s7 = ssub.s32 1, %s5
  %s8 = scalar_select 0, %s7, %s5
  loop: start=0, step=1, limit=5
  $region2: #{fourier_unit_forward.3} parent=0 // loop_pre_header
    _
  $region3: #{fourier_unit_forward.3} parent=0 // loop_header
    %s10 = sphi 0, %s14
    %p11 = scmp.ge.s32.totalorder %s10, 5
    %s18 = sphi 0, %s18
    %s20 = sphi 0, %s18
    %s21 = sphi 0, %s20
    %s35 = sphi 0, %s21
    %s39 = sphi 0, %s39
    %s41 = sphi 0, %s39
    %s42 = sphi 0, %s41
    %s56 = sphi 0, %s42
    %s60 = sphi 0, %s60
    %s62 = sphi 0, %s60
    %s63 = sphi 0, %s62
    %s77 = sphi 0, %s63
    %s83 = sphi 0, %s85
    %s86 = sphi 0, %s83
    %s87 = sphi 0, %s86
    %s103 = sphi 0, %s87
    %s109 = sphi 0, %s111
    %s112 = sphi 0, %s109
    %s113 = sphi 0, %s112
    %s129 = sphi 0, %s113
  $region4: #{fourier_unit_forward.3} parent=0 // loop_header_branch
    %13 = sbr.rel (%p11) target = $region8
  $region5: #{fourier_unit_forward.3} parent=0 // loop_body
    %s15 = ssub.s32 %s10, 1
    %s16 = ssub.s32 %s10, 2
    %s17 = sadd.s32 %s10, 1
    %s19 = sadd.s32 %s18, 1
    %p22 = scmp.eq.s32.totalorder %s10, 2
    %p23 = scmp.ne.s32.totalorder %s18, %s20
    %p24 = scmp.eq.s32.totalorder %s10, 0
    %p25 = por %p23, %p24
    %p26 = scmp.ne.s32.totalorder %s18, %s20
    %p27 = scmp.eq.s32.totalorder %s15, 2
    %p28 = por %p26, %p27
    %p29 = scmp.ne.s32.totalorder %s20, %s21
    %p30 = scmp.eq.s32.totalorder %s15, 0
    %p31 = por %p29, %p30
    %p32 = scmp.ne.s32.totalorder %s20, %s21
    %p33 = scmp.eq.s32.totalorder %s16, 2
    %p34 = por %p32, %p33
    %p36 = scmp.ne.s32.totalorder %s21, %s35
    %p37 = scmp.eq.s32.totalorder %s16, 0
    %p38 = por %p36, %p37
    %s40 = sadd.s32 %s39, 1
    %p43 = scmp.eq.s32.totalorder %s10, 2
    %p44 = scmp.ne.s32.totalorder %s39, %s41
    %p45 = scmp.eq.s32.totalorder %s10, 0
    %p46 = por %p44, %p45
    %p47 = scmp.ne.s32.totalorder %s39, %s41
    %p48 = scmp.eq.s32.totalorder %s15, 2
    %p49 = por %p47, %p48
    %p50 = scmp.ne.s32.totalorder %s41, %s42
    %p51 = scmp.eq.s32.totalorder %s15, 0
    %p52 = por %p50, %p51
    %p53 = scmp.ne.s32.totalorder %s41, %s42
    %p54 = scmp.eq.s32.totalorder %s16, 2
    %p55 = por %p53, %p54
    %p57 = scmp.ne.s32.totalorder %s42, %s56
    %p58 = scmp.eq.s32.totalorder %s16, 0
    %p59 = por %p57, %p58
    %s61 = sadd.s32 %s60, 1
    %p64 = scmp.eq.s32.totalorder %s10, 2
    %p65 = scmp.ne.s32.totalorder %s60, %s62
    %p66 = scmp.eq.s32.totalorder %s10, 0
    %p67 = por %p65, %p66
    %p68 = scmp.ne.s32.totalorder %s60, %s62
    %p69 = scmp.eq.s32.totalorder %s15, 2
    %p70 = por %p68, %p69
    %p71 = scmp.ne.s32.totalorder %s62, %s63
    %p72 = scmp.eq.s32.totalorder %s15, 0
    %p73 = por %p71, %p72
    %p74 = scmp.ne.s32.totalorder %s62, %s63
    %p75 = scmp.eq.s32.totalorder %s16, 2
    %p76 = por %p74, %p75
    %p78 = scmp.ne.s32.totalorder %s63, %s77
    %p79 = scmp.eq.s32.totalorder %s16, 0
    %p80 = por %p78, %p79
    %s81 = ssub.s32 %s10, %s17
    %p82 = scmp.eq.s32.totalorder %s81, 0
    %s84 = sadd.s32 %s83, 1
    %s85 = scalar_select %p82, %s83, %s84
    %p88 = pneg %p82
    %p89 = scmp.eq.s32.totalorder %s10, 2
    %p90 = por %p88, %p89
    %p91 = scmp.ne.s32.totalorder %s83, %s86
    %p92 = scmp.eq.s32.totalorder %s10, 0
    %p93 = por %p91, %p92
    %p94 = scmp.ne.s32.totalorder %s83, %s86
    %p95 = scmp.eq.s32.totalorder %s15, 2
    %p96 = por %p94, %p95
    %p97 = scmp.ne.s32.totalorder %s86, %s87
    %p98 = scmp.eq.s32.totalorder %s15, 0
    %p99 = por %p97, %p98
    %p100 = scmp.ne.s32.totalorder %s86, %s87
    %p101 = scmp.eq.s32.totalorder %s16, 2
    %p102 = por %p100, %p101
    %p104 = scmp.ne.s32.totalorder %s87, %s103
    %p105 = scmp.eq.s32.totalorder %s16, 0
    %p106 = por %p104, %p105
    %s107 = ssub.s32 %s10, %s17
    %p108 = scmp.eq.s32.totalorder %s107, 0
    %s110 = sadd.s32 %s109, 1
    %s111 = scalar_select %p108, %s109, %s110
    %p114 = pneg %p108
    %p115 = scmp.eq.s32.totalorder %s10, 2
    %p116 = por %p114, %p115
    %p117 = scmp.ne.s32.totalorder %s109, %s112
    %p118 = scmp.eq.s32.totalorder %s10, 0
    %p119 = por %p117, %p118
    %p120 = scmp.ne.s32.totalorder %s109, %s112
    %p121 = scmp.eq.s32.totalorder %s15, 2
    %p122 = por %p120, %p121
    %p123 = scmp.ne.s32.totalorder %s112, %s113
    %p124 = scmp.eq.s32.totalorder %s15, 0
    %p125 = por %p123, %p124
    %p126 = scmp.ne.s32.totalorder %s112, %s113
    %p127 = scmp.eq.s32.totalorder %s16, 2
    %p128 = por %p126, %p127
    %p130 = scmp.ne.s32.totalorder %s113, %s129
    %p131 = scmp.eq.s32.totalorder %s16, 0
    %p132 = por %p130, %p131
    %p133 = scmp.le.s32.totalorder 1, %s10
    %p134 = scmp.lt.s32.totalorder %s10, 4
    %p135 = pnand %p133, %p134
    %p136 = pneg %p135
    // Predicated region
    $region9: #{fourier_unit_forward.3} parent=5 // pred_check
      _
    $region10: #{fourier_unit_forward.3} parent=5 // pred_check_branch
      %138 = sbr.rel (%p135) target = $region12
    $region11: #{fourier_unit_forward.3} parent=5 // pred_region
      %s139 = ssub.s32 %s10, 1
      // Predicated region
      $region13: #{fourier_unit_forward.3} parent=11 // pred_check
        %p140 = pneg %p31
      $region14: #{fourier_unit_forward.3} parent=11 // pred_check_branch
        %142 = sbr.rel (%p140) target = $region16
      $region15: #{fourier_unit_forward.3} parent=11 // pred_region
        _
      $region16: #{fourier_unit_forward.3} parent=11 // pred_fallthru
        _
      // Predicated region
      $region17: #{fourier_unit_forward.3} parent=11 // pred_check
        %p143 = pneg %p52
      $region18: #{fourier_unit_forward.3} parent=11 // pred_check_branch
        %145 = sbr.rel (%p143) target = $region20
      $region19: #{fourier_unit_forward.3} parent=11 // pred_region
        _
      $region20: #{fourier_unit_forward.3} parent=11 // pred_fallthru
        _
      // Predicated region
      $region21: #{fourier_unit_forward.3} parent=11 // pred_check
        %p146 = pneg %p73
      $region22: #{fourier_unit_forward.3} parent=11 // pred_check_branch
        %148 = sbr.rel (%p146) target = $region24
      $region23: #{fourier_unit_forward.3} parent=11 // pred_region
        _
      $region24: #{fourier_unit_forward.3} parent=11 // pred_fallthru
        _
    $region12: #{fourier_unit_forward.3} parent=5 // pred_fallthru
      _
    %p149 = scmp.lt.s32.totalorder %s10, 3
    // Predicated region
    $region25: #{fourier_unit_forward.3} parent=5 // pred_check
      %p150 = pneg %p149
    $region26: #{fourier_unit_forward.3} parent=5 // pred_check_branch
      %152 = sbr.rel (%p150) target = $region28
    $region27: #{fourier_unit_forward.3} parent=5 // pred_region
      // Predicated region
      $region29: #{fourier_unit_forward.3} parent=27 // pred_check
        %p153 = pneg %p93
      $region30: #{fourier_unit_forward.3} parent=27 // pred_check_branch
        %155 = sbr.rel (%p153) target = $region32
      $region31: #{fourier_unit_forward.3} parent=27 // pred_region
        %p156 = scmp.lt.s32.totalorder %s10, 2
        %s157 = scalar_select %p156, %s10, 2
        %s158 = smul.addr %s157, 8
        %s159 = scalar_lea.vmem %s3, %s158
      $region32: #{fourier_unit_forward.3} parent=27 // pred_fallthru
        _
    $region28: #{fourier_unit_forward.3} parent=5 // pred_fallthru
      _
    %p160 = scmp.le.s32.totalorder 1, %s10
    %p161 = scmp.lt.s32.totalorder %s10, 4
    %p162 = pnand %p160, %p161
    %p163 = pneg %p162
    // Predicated region
    $region33: #{fourier_unit_forward.3} parent=5 // pred_check
      _
    $region34: #{fourier_unit_forward.3} parent=5 // pred_check_branch
      %165 = sbr.rel (%p162) target = $region36
    $region35: #{fourier_unit_forward.3} parent=5 // pred_region
      %s166 = ssub.s32 %s10, 1
      %p167 = pneg %p31
      %p168 = pneg %p28
      %p169 = pneg %p52
      %p170 = pneg %p49
      %p171 = pneg %p73
      %p172 = pneg %p70
      %p173 = scmp.lt.s32.totalorder %s15, 2
      %s174 = scalar_select %p173, %s15, 2
      %s175 = smul.addr %s174, 8
      %s176 = scalar_lea.vmem %s3, %s175
      %p177 = pneg %p99
      %p178 = pneg %p96
      %p179 = pneg %p125
      %p180 = pneg %p122
      %p181 = scmp.lt.s32.totalorder %s15, 2
      %s182 = scalar_select %p181, %s15, 2
      %s183 = smul.addr %s182, 8
      %s184 = scalar_lea.vmem %s4, %s183
      %p185 = scmp.lt.s32.totalorder %s15, 2
      %s186 = scalar_select %p185, %s15, 2
      %s187 = smul.addr %s186, 8
      %s188 = scalar_lea.vmem %s3, %s187
      %p189 = scmp.lt.s32.totalorder %s15, 2
      %s190 = scalar_select %p189, %s15, 2
      %s191 = smul.addr %s190, 8
      %s192 = scalar_lea.vmem %s4, %s191
      %v193 = vld [vmem:[%s0] sm:$0xff]
      %v194 = vld [vmem:[%s188] sm:$0xff]
      %vm195 = vcmask 64512
      %v197 = vsel %vm195, %v193, 0
      %199 = vmatprep.subr.mxu0 0.0
      %200 = vmatpush1.msra.mxu0 0.0
      %201 = vmatprep.subr.mxu0 0.0
      %202 = vmatpush1.msra.mxu0 0.0
      %203 = vmatprep.subr.mxu0 0.0
      %204 = vmatpush1.msra.mxu0 0.0
      %205 = vmatprep.subr.mxu0 0.0
      %206 = vmatpush1.msra.mxu0 0.0
      %207 = vmatprep.subr.mxu0 0.0
      %208 = vmatpush1.msra.mxu0 0.0
      %209 = vmatprep.subr.mxu0 0.0
      %210 = vmatpush1.msra.mxu0 0.0
      %211 = vmatprep.subr.mxu0 0.0
      %212 = vmatpush1.msra.mxu0 0.0
      %213 = vmatprep.subr.mxu0 0.0
      %214 = vmatpush1.msra.mxu0 0.0
      %215 = vmatprep.subr.mxu0 0.0
      %216 = vmatpush1.msra.mxu0 0.0
      %217 = vmatprep.subr.mxu0 0.0
      %218 = vmatpush1.msra.mxu0 0.0
      %219 = vmatprep.subr.mxu0 0.0
      %220 = vmatpush1.msra.mxu0 0.0
      %221 = vmatprep.subr.mxu0 0.0
      %222 = vmatpush1.msra.mxu0 0.0
      %223 = vmatprep.subr.mxu0 0.0
      %224 = vmatpush1.msra.mxu0 0.0
      %225 = vmatprep.subr.mxu0 0.0
      %226 = vmatpush1.msra.mxu0 0.0
      %227 = vmatprep.subr.mxu0 0.0
      %228 = vmatpush1.msra.mxu0 0.0
      %229 = vmatprep.subr.mxu0 0.0
      %230 = vmatpush1.msra.mxu0 %v194
      %231 = vmatprep.subr.mxu0 0.0
      %232 = vmatpush2.msra.mxu0 0.0
      %233 = vmatprep.subr.mxu0 0.0
      %234 = vmatpush2.msra.mxu0 0.0
      %235 = vmatprep.subr.mxu0 0.0
      %236 = vmatpush2.msra.mxu0 0.0
      %237 = vmatprep.subr.mxu0 0.0
      %238 = vmatpush2.msra.mxu0 0.0
      %239 = vmatprep.subr.mxu0 0.0
      %240 = vmatpush2.msra.mxu0 0.0
      %241 = vmatprep.subr.mxu0 0.0
      %242 = vmatpush2.msra.mxu0 0.0
      %243 = vmatprep.subr.mxu0 0.0
      %244 = vmatpush2.msra.mxu0 0.0
      %245 = vmatprep.subr.mxu0 0.0
      %246 = vmatpush2.msra.mxu0 0.0
      %247 = vmatprep.subr.mxu0 0.0
      %248 = vmatpush2.msra.mxu0 0.0
      %249 = vmatprep.subr.mxu0 0.0
      %250 = vmatpush2.msra.mxu0 0.0
      %251 = vmatprep.subr.mxu0 0.0
      %252 = vmatpush2.msra.mxu0 0.0
      %253 = vmatprep.subr.mxu0 0.0
      %254 = vmatpush2.msra.mxu0 0.0
      %255 = vmatprep.subr.mxu0 0.0
      %256 = vmatpush2.msra.mxu0 0.0
      %257 = vmatprep.subr.mxu0 0.0
      %258 = vmatpush2.msra.mxu0 0.0
      %259 = vmatprep.subr.mxu0 0.0
      %260 = vmatpush2.msra.mxu0 0.0
      %261 = vmatprep.subr.mxu0 0.0
      %262 = vmatpush2.msra.mxu0 0.0
      %263 = vmatprep.mubr.f32.mxu0 0.0
      %264 = vmatmul.mubr.f32.gmra.mxu0 %v197
      %v265 = vpop.f32.mrf.mxu0
      %v266 = vadd.f32 0.0, %v265
      %v267 = vpop.f32.mrf.mxu0
      %268 = vdwg.mxu0
      %v269 = vld [vmem:[%s1] sm:$0xff]
      %271 = vset.pattern.permute.xlu0 0
      %272 = vperm.xlu0 %271, %v269
      %v273 = vpop.permute.xlu0 %272
      %v275 = vmul.f32 %v266, %v273
      %v276 = vld [vmem:[%s2] sm:$0xff]
      %278 = vset.pattern.permute.xlu0 0
      %279 = vperm.xlu0 %278, %v276
      %v280 = vpop.permute.xlu0 %279
      %v282 = vadd.f32 %v275, %v280
      %v283 = vmax.f32 %v282, 0.0
      %284 = vst [vmem:[%s192] sm:$0xff] %v283
      %p285 = scmp.lt.s32.totalorder %s15, 2
      %s286 = scalar_select %p285, %s15, 2
      %s287 = smul.addr %s286, 8
      %s288 = scalar_lea.vmem %s4, %s287
      // Predicated region
      $region37: #{fourier_unit_forward.3} parent=35 // pred_check
        %p289 = pneg %p122
      $region38: #{fourier_unit_forward.3} parent=35 // pred_check_branch
        %291 = sbr.rel (%p289) target = $region40
      $region39: #{fourier_unit_forward.3} parent=35 // pred_region
        _
      $region40: #{fourier_unit_forward.3} parent=35 // pred_fallthru
        _
    $region36: #{fourier_unit_forward.3} parent=5 // pred_fallthru
      _
    %p292 = scmp.le.s32.totalorder 2, %s10
    // Predicated region
    $region41: #{fourier_unit_forward.3} parent=5 // pred_check
      %p293 = pneg %p292
    $region42: #{fourier_unit_forward.3} parent=5 // pred_check_branch
      %295 = sbr.rel (%p293) target = $region44
    $region43: #{fourier_unit_forward.3} parent=5 // pred_region
      %s296 = ssub.s32 %s10, 2
      // Predicated region
      $region45: #{fourier_unit_forward.3} parent=43 // pred_check
        %p297 = pneg %p128
      $region46: #{fourier_unit_forward.3} parent=43 // pred_check_branch
        %299 = sbr.rel (%p297) target = $region48
      $region47: #{fourier_unit_forward.3} parent=43 // pred_region
        %p300 = scmp.lt.s32.totalorder %s16, 2
        %s301 = scalar_select %p300, %s16, 2
        %s302 = smul.addr %s301, 8
        %s303 = scalar_lea.vmem %s4, %s302
      $region48: #{fourier_unit_forward.3} parent=43 // pred_fallthru
        _
    $region44: #{fourier_unit_forward.3} parent=5 // pred_fallthru
      _
  $region6: #{fourier_unit_forward.3} parent=0 // loop_footer
    %s14 = sadd.s32 1, %s10
  $region7: #{fourier_unit_forward.3} parent=0 // loop_footer_branch
    %9 = sbr.rel target = $region3
  $region8: #{fourier_unit_forward.3} parent=0 // loop_exit
    _

// kernel: reverse.0
$region0: #{reverse.0}
  %s0 = inlined_call_operand.vmem [shape: f32[4,2,16,7], index: 0, kind: input, shape index: {}]
  %s1 = inlined_call_operand.vmem [shape: f32[4,2,16,7], index: 1, kind: output, shape index: {}]
  $region1: #{reverse.0} parent=0
    #allocation0 [shape = 'u8[65536]{0}', space=vmem, size = 0x10000, scoped, tag = 'operand span for operand 0']
    #allocation1 [shape = 'u8[32768]{0}', space=vmem, size = 0x8000, scoped, tag = 'operand span for operand 1']
    %s2 = scalar_lea.vmem [#allocation0], 8
    // Predicated region
    $region2: #{reverse.0} parent=1 // pred_check
      _
    $region3: #{reverse.0} parent=1 // pred_check_branch
      %4 = sbr.rel (0) target = $region5
    $region4: #{reverse.0} parent=1 // pred_region
      // Predicated region
      $region6: #{reverse.0} parent=4 // pred_check
        _
      $region7: #{reverse.0} parent=4 // pred_check_branch
        %6 = sbr.rel (0) target = $region9
      $region8: #{reverse.0} parent=4 // pred_region
        // Predicated region
        $region21: #{reverse.0} parent=8 // pred_check
          _
        $region22: #{reverse.0} parent=8 // pred_check_branch
          %36 = sbr.rel (0) target = $region24
        $region23: #{reverse.0} parent=8 // pred_region
          loop: start=0, step=1, limit=1
          $region25: #{reverse.0} parent=23 // loop_pre_header
            _
          $region26: #{reverse.0} parent=23 // loop_header
            %s38 = sphi 0, %s42
            %p39 = scmp.ge.s32.totalorder %s38, 1
            %s43 = sphi %s0, %s0
            %s44 = sphi %s2, %s2
          $region27: #{reverse.0} parent=23 // loop_header_branch
            %41 = sbr.rel (%p39) target = $region31
          $region28: #{reverse.0} parent=23 // loop_body
            %v45 = vld [vmem:[%s43] sm:$0xff]
            %46 = vst [vmem:[%s44] sm:$0xff] %v45
            %v47 = vld [vmem:[%s43 + $0x8] sm:$0xff]
            %48 = vst [vmem:[%s44 + $0x10] sm:$0xff] %v47
            %v49 = vld [vmem:[%s43 + $0x10] sm:$0xff]
            %50 = vst [vmem:[%s44 + $0x20] sm:$0xff] %v49
            %v51 = vld [vmem:[%s43 + $0x18] sm:$0xff]
            %52 = vst [vmem:[%s44 + $0x30] sm:$0xff] %v51
            %v53 = vld [vmem:[%s43 + $0x20] sm:$0xff]
            %54 = vst [vmem:[%s44 + $0x40] sm:$0xff] %v53
            %v55 = vld [vmem:[%s43 + $0x28] sm:$0xff]
            %56 = vst [vmem:[%s44 + $0x50] sm:$0xff] %v55
            %v57 = vld [vmem:[%s43 + $0x30] sm:$0xff]
            %58 = vst [vmem:[%s44 + $0x60] sm:$0xff] %v57
            %v59 = vld [vmem:[%s43 + $0x38] sm:$0xff]
            %60 = vst [vmem:[%s44 + $0x70] sm:$0xff] %v59
          $region29: #{reverse.0} parent=23 // loop_footer
            %s42 = sadd.s32 1, %s38
          $region30: #{reverse.0} parent=23 // loop_footer_branch
            %37 = sbr.rel target = $region26
          $region31: #{reverse.0} parent=23 // loop_exit
            _
        $region24: #{reverse.0} parent=8 // pred_fallthru
          _
        // Predicated region
        $region32: #{reverse.0} parent=8 // pred_check
          _
        $region33: #{reverse.0} parent=8 // pred_check_branch
          %62 = sbr.rel target = $region35
        $region34: #{reverse.0} parent=8 // pred_region
          _
        $region35: #{reverse.0} parent=8 // pred_fallthru
          _
      $region9: #{reverse.0} parent=4 // pred_fallthru
        _
      // Predicated region
      $region10: #{reverse.0} parent=4 // pred_check
        _
      $region11: #{reverse.0} parent=4 // pred_check_branch
        %8 = sbr.rel target = $region13
      $region12: #{reverse.0} parent=4 // pred_region
        %s10 = ssub.s32 256, 1
        loop: start=0, step=1, limit=1
        $region14: #{reverse.0} parent=12 // loop_pre_header
          _
        $region15: #{reverse.0} parent=12 // loop_header
          %s12 = sphi 0, %s16
          %p13 = scmp.ge.s32.totalorder %s12, 1
          %s17 = sphi %s0, %s0
          %s18 = sphi %s2, %s2
        $region16: #{reverse.0} parent=12 // loop_header_branch
          %15 = sbr.rel (%p13) target = $region20
        $region17: #{reverse.0} parent=12 // loop_body
          %v19 = vld [vmem:[%s17] sm:%s10]
          %20 = vst [vmem:[%s18] sm:%s10] %v19
          %v21 = vld [vmem:[%s17 + $0x8] sm:%s10]
          %22 = vst [vmem:[%s18 + $0x10] sm:%s10] %v21
          %v23 = vld [vmem:[%s17 + $0x10] sm:%s10]
          %24 = vst [vmem:[%s18 + $0x20] sm:%s10] %v23
          %v25 = vld [vmem:[%s17 + $0x18] sm:%s10]
          %26 = vst [vmem:[%s18 + $0x30] sm:%s10] %v25
          %v27 = vld [vmem:[%s17 + $0x20] sm:%s10]
          %28 = vst [vmem:[%s18 + $0x40] sm:%s10] %v27
          %v29 = vld [vmem:[%s17 + $0x28] sm:%s10]
          %30 = vst [vmem:[%s18 + $0x50] sm:%s10] %v29
          %v31 = vld [vmem:[%s17 + $0x30] sm:%s10]
          %32 = vst [vmem:[%s18 + $0x60] sm:%s10] %v31
          %v33 = vld [vmem:[%s17 + $0x38] sm:%s10]
          %34 = vst [vmem:[%s18 + $0x70] sm:%s10] %v33
        $region18: #{reverse.0} parent=12 // loop_footer
          %s16 = sadd.s32 1, %s12
        $region19: #{reverse.0} parent=12 // loop_footer_branch
          %11 = sbr.rel target = $region15
        $region20: #{reverse.0} parent=12 // loop_exit
          _
      $region13: #{reverse.0} parent=4 // pred_fallthru
        _
    $region5: #{reverse.0} parent=1 // pred_fallthru
      _
    %63 = vnop
    %s64 = scalar_lea.vmem [#allocation0], 7
    %v65 = vld [vmem:[%s64] ss:$-1 sm:$0xff]
    %v66 = vrot.slane %v65, 1
    %67 = vst [vmem:[#allocation1] sm:$0xff] %v66
    %s68 = scalar_lea.vmem [#allocation0], 8
    %s69 = scalar_lea.vmem %s68, 7 [#allocation0]
    %v70 = vld [vmem:[%s69] ss:$-1 sm:$0xff]
    %v71 = vrot.slane %v70, 1
    %v72 = vlaneseq
    %v73 = vshrl.u32 %v72, 7
    %vm74 = vcmp.lt.s32.totalorder %v73, 7
    %75 = vst.msk [vmem:[#allocation1] sm:$0xff] %vm74, %v71
    %s76 = scalar_lea.vmem [#allocation1], 8
    %s77 = scalar_lea.vmem [#allocation0], 16
    %s78 = scalar_lea.vmem %s77, 7 [#allocation0]
    %v79 = vld [vmem:[%s78] ss:$-1 sm:$0xff]
    %v80 = vrot.slane %v79, 1
    %81 = vst [vmem:[%s76] sm:$0xff] %v80
    %s82 = scalar_lea.vmem %s77, 8 [#allocation0]
    %s83 = scalar_lea.vmem %s82, 7 [#allocation0]
    %v84 = vld [vmem:[%s83] ss:$-1 sm:$0xff]
    %v85 = vrot.slane %v84, 1
    %v86 = vlaneseq
    %v87 = vshrl.u32 %v86, 7
    %vm88 = vcmp.lt.s32.totalorder %v87, 7
    %89 = vst.msk [vmem:[%s76] sm:$0xff] %vm88, %v85
    %s90 = scalar_lea.vmem [#allocation1], 16
    %s91 = scalar_lea.vmem [#allocation0], 32
    %s92 = scalar_lea.vmem %s91, 7 [#allocation0]
    %v93 = vld [vmem:[%s92] ss:$-1 sm:$0xff]
    %v94 = vrot.slane %v93, 1
    %95 = vst [vmem:[%s90] sm:$0xff] %v94
    %s96 = scalar_lea.vmem %s91, 8 [#allocation0]
    %s97 = scalar_lea.vmem %s96, 7 [#allocation0]
    %v98 = vld [vmem:[%s97] ss:$-1 sm:$0xff]
    %v99 = vrot.slane %v98, 1
    %v100 = vlaneseq
    %v101 = vshrl.u32 %v100, 7
    %vm102 = vcmp.lt.s32.totalorder %v101, 7
    %103 = vst.msk [vmem:[%s90] sm:$0xff] %vm102, %v99
    %s104 = scalar_lea.vmem [#allocation1], 24
    %s105 = scalar_lea.vmem [#allocation0], 48
    %s106 = scalar_lea.vmem %s105, 7 [#allocation0]
    %v107 = vld [vmem:[%s106] ss:$-1 sm:$0xff]
    %v108 = vrot.slane %v107, 1
    %109 = vst [vmem:[%s104] sm:$0xff] %v108
    %s110 = scalar_lea.vmem %s105, 8 [#allocation0]
    %s111 = scalar_lea.vmem %s110, 7 [#allocation0]
    %v112 = vld [vmem:[%s111] ss:$-1 sm:$0xff]
    %v113 = vrot.slane %v112, 1
    %v114 = vlaneseq
    %v115 = vshrl.u32 %v114, 7
    %vm116 = vcmp.lt.s32.totalorder %v115, 7
    %117 = vst.msk [vmem:[%s104] sm:$0xff] %vm116, %v113
    %s118 = scalar_lea.vmem [#allocation1], 32
    %s119 = scalar_lea.vmem [#allocation0], 64
    %s120 = scalar_lea.vmem %s119, 7 [#allocation0]
    %v121 = vld [vmem:[%s120] ss:$-1 sm:$0xff]
    %v122 = vrot.slane %v121, 1
    %123 = vst [vmem:[%s118] sm:$0xff] %v122
    %s124 = scalar_lea.vmem %s119, 8 [#allocation0]
    %s125 = scalar_lea.vmem %s124, 7 [#allocation0]
    %v126 = vld [vmem:[%s125] ss:$-1 sm:$0xff]
    %v127 = vrot.slane %v126, 1
    %v128 = vlaneseq
    %v129 = vshrl.u32 %v128, 7
    %vm130 = vcmp.lt.s32.totalorder %v129, 7
    %131 = vst.msk [vmem:[%s118] sm:$0xff] %vm130, %v127
    %s132 = scalar_lea.vmem [#allocation1], 40
    %s133 = scalar_lea.vmem [#allocation0], 80
    %s134 = scalar_lea.vmem %s133, 7 [#allocation0]
    %v135 = vld [vmem:[%s134] ss:$-1 sm:$0xff]
    %v136 = vrot.slane %v135, 1
    %137 = vst [vmem:[%s132] sm:$0xff] %v136
    %s138 = scalar_lea.vmem %s133, 8 [#allocation0]
    %s139 = scalar_lea.vmem %s138, 7 [#allocation0]
    %v140 = vld [vmem:[%s139] ss:$-1 sm:$0xff]
    %v141 = vrot.slane %v140, 1
    %v142 = vlaneseq
    %v143 = vshrl.u32 %v142, 7
    %vm144 = vcmp.lt.s32.totalorder %v143, 7
    %145 = vst.msk [vmem:[%s132] sm:$0xff] %vm144, %v141
    %s146 = scalar_lea.vmem [#allocation1], 48
    %s147 = scalar_lea.vmem [#allocation0], 96
    %s148 = scalar_lea.vmem %s147, 7 [#allocation0]
    %v149 = vld [vmem:[%s148] ss:$-1 sm:$0xff]
    %v150 = vrot.slane %v149, 1
    %151 = vst [vmem:[%s146] sm:$0xff] %v150
    %s152 = scalar_lea.vmem %s147, 8 [#allocation0]
    %s153 = scalar_lea.vmem %s152, 7 [#allocation0]
    %v154 = vld [vmem:[%s153] ss:$-1 sm:$0xff]
    %v155 = vrot.slane %v154, 1
    %v156 = vlaneseq
    %v157 = vshrl.u32 %v156, 7
    %vm158 = vcmp.lt.s32.totalorder %v157, 7
    %159 = vst.msk [vmem:[%s146] sm:$0xff] %vm158, %v155
    %s160 = scalar_lea.vmem [#allocation1], 56
    %s161 = scalar_lea.vmem [#allocation0], 112
    %s162 = scalar_lea.vmem %s161, 7 [#allocation0]
    %v163 = vld [vmem:[%s162] ss:$-1 sm:$0xff]
    %v164 = vrot.slane %v163, 1
    %165 = vst [vmem:[%s160] sm:$0xff] %v164
    %s166 = scalar_lea.vmem %s161, 8 [#allocation0]
    %s167 = scalar_lea.vmem %s166, 7 [#allocation0]
    %v168 = vld [vmem:[%s167] ss:$-1 sm:$0xff]
    %v169 = vrot.slane %v168, 1
    %v170 = vlaneseq
    %v171 = vshrl.u32 %v170, 7
    %vm172 = vcmp.lt.s32.totalorder %v171, 7
    %173 = vst.msk [vmem:[%s160] sm:$0xff] %vm172, %v169
    // Predicated region
    $region36: #{reverse.0} parent=1 // pred_check
      _
    $region37: #{reverse.0} parent=1 // pred_check_branch
      %175 = sbr.rel (0) target = $region39
    $region38: #{reverse.0} parent=1 // pred_region
      // Predicated region
      $region40: #{reverse.0} parent=38 // pred_check
        _
      $region41: #{reverse.0} parent=38 // pred_check_branch
        %177 = sbr.rel (0) target = $region43
      $region42: #{reverse.0} parent=38 // pred_region
        // Predicated region
        $region55: #{reverse.0} parent=42 // pred_check
          _
        $region56: #{reverse.0} parent=42 // pred_check_branch
          %207 = sbr.rel (0) target = $region58
        $region57: #{reverse.0} parent=42 // pred_region
          loop: start=0, step=1, limit=1
          $region59: #{reverse.0} parent=57 // loop_pre_header
            _
          $region60: #{reverse.0} parent=57 // loop_header
            %s209 = sphi 0, %s213
            %p210 = scmp.ge.s32.totalorder %s209, 1
            %s214 = sphi [#allocation1], [#allocation1]
            %s215 = sphi %s1, %s1
          $region61: #{reverse.0} parent=57 // loop_header_branch
            %212 = sbr.rel (%p210) target = $region65
          $region62: #{reverse.0} parent=57 // loop_body
            %v216 = vld [vmem:[%s214] sm:$0xff]
            %217 = vst [vmem:[%s215] sm:$0xff] %v216
            %v218 = vld [vmem:[%s214 + $0x8] sm:$0xff]
            %219 = vst [vmem:[%s215 + $0x8] sm:$0xff] %v218
            %v220 = vld [vmem:[%s214 + $0x10] sm:$0xff]
            %221 = vst [vmem:[%s215 + $0x10] sm:$0xff] %v220
            %v222 = vld [vmem:[%s214 + $0x18] sm:$0xff]
            %223 = vst [vmem:[%s215 + $0x18] sm:$0xff] %v222
            %v224 = vld [vmem:[%s214 + $0x20] sm:$0xff]
            %225 = vst [vmem:[%s215 + $0x20] sm:$0xff] %v224
            %v226 = vld [vmem:[%s214 + $0x28] sm:$0xff]
            %227 = vst [vmem:[%s215 + $0x28] sm:$0xff] %v226
            %v228 = vld [vmem:[%s214 + $0x30] sm:$0xff]
            %229 = vst [vmem:[%s215 + $0x30] sm:$0xff] %v228
            %v230 = vld [vmem:[%s214 + $0x38] sm:$0xff]
            %231 = vst [vmem:[%s215 + $0x38] sm:$0xff] %v230
          $region63: #{reverse.0} parent=57 // loop_footer
            %s213 = sadd.s32 1, %s209
          $region64: #{reverse.0} parent=57 // loop_footer_branch
            %208 = sbr.rel target = $region60
          $region65: #{reverse.0} parent=57 // loop_exit
            _
        $region58: #{reverse.0} parent=42 // pred_fallthru
          _
        // Predicated region
        $region66: #{reverse.0} parent=42 // pred_check
          _
        $region67: #{reverse.0} parent=42 // pred_check_branch
          %233 = sbr.rel target = $region69
        $region68: #{reverse.0} parent=42 // pred_region
          _
        $region69: #{reverse.0} parent=42 // pred_fallthru
          _
      $region43: #{reverse.0} parent=38 // pred_fallthru
        _
      // Predicated region
      $region44: #{reverse.0} parent=38 // pred_check
        _
      $region45: #{reverse.0} parent=38 // pred_check_branch
        %179 = sbr.rel target = $region47
      $region46: #{reverse.0} parent=38 // pred_region
        %s181 = ssub.s32 256, 1
        loop: start=0, step=1, limit=1
        $region48: #{reverse.0} parent=46 // loop_pre_header
          _
        $region49: #{reverse.0} parent=46 // loop_header
          %s183 = sphi 0, %s187
          %p184 = scmp.ge.s32.totalorder %s183, 1
          %s188 = sphi [#allocation1], [#allocation1]
          %s189 = sphi %s1, %s1
        $region50: #{reverse.0} parent=46 // loop_header_branch
          %186 = sbr.rel (%p184) target = $region54
        $region51: #{reverse.0} parent=46 // loop_body
          %v190 = vld [vmem:[%s188] sm:%s181]
          %191 = vst [vmem:[%s189] sm:%s181] %v190
          %v192 = vld [vmem:[%s188 + $0x8] sm:%s181]
          %193 = vst [vmem:[%s189 + $0x8] sm:%s181] %v192
          %v194 = vld [vmem:[%s188 + $0x10] sm:%s181]
          %195 = vst [vmem:[%s189 + $0x10] sm:%s181] %v194
          %v196 = vld [vmem:[%s188 + $0x18] sm:%s181]
          %197 = vst [vmem:[%s189 + $0x18] sm:%s181] %v196
          %v198 = vld [vmem:[%s188 + $0x20] sm:%s181]
          %199 = vst [vmem:[%s189 + $0x20] sm:%s181] %v198
          %v200 = vld [vmem:[%s188 + $0x28] sm:%s181]
          %201 = vst [vmem:[%s189 + $0x28] sm:%s181] %v200
          %v202 = vld [vmem:[%s188 + $0x30] sm:%s181]
          %203 = vst [vmem:[%s189 + $0x30] sm:%s181] %v202
          %v204 = vld [vmem:[%s188 + $0x38] sm:%s181]
          %205 = vst [vmem:[%s189 + $0x38] sm:%s181] %v204
        $region52: #{reverse.0} parent=46 // loop_footer
          %s187 = sadd.s32 1, %s183
        $region53: #{reverse.0} parent=46 // loop_footer_branch
          %182 = sbr.rel target = $region49
        $region54: #{reverse.0} parent=46 // loop_exit
          _
      $region47: #{reverse.0} parent=38 // pred_fallthru
        _
    $region39: #{reverse.0} parent=1 // pred_fallthru
      _
    %234 = vnop

</llo_original>
